<compile_context>
chip_gen: v7x
topology: tpu7x:2x2x1
jax: 0.10.0
libtpu: 0.0.40
codegen_flags: <defaults>
</compile_context>

<pallas_src>
import numpy as np
import jax
import jax.numpy as jnp
from jax.experimental import pallas as pl
from jax.experimental.pallas import tpu as pltpu

_LANES = 128
_CHUNK_ROWS = 1024          # rows per inner-loop step (multiple of 32 -> any packing)


def _cdiv(a, b):
    return -(-a // b)


def _sublane_pack(itemsize):
    # Sublane packing: f32 -> 8, bf16/f16 -> 16, int8/fp8 -> 32.
    return {1: 32, 2: 16, 4: 8}.get(int(itemsize), 8)


def _tensorcores_per_chip():
    # Best-effort TensorCore count; only multi-TC chips (v7x) benefit from a split.
    try:
        kind = jax.devices()[0].device_kind.lower()
    except Exception:
        return 1
    return 2 if "v7" in kind else 1


def _plan_tiles(rows, pack, itemsize, target_block_bytes, num_cores):
    """Pick (rows_tile, num_splits, tiles_per_split) with exact coverage:
    every grid tile holds >= 1 valid row and only the globally-last tile may be
    partial, so there are no clamped duplicate-tile DMAs."""
    target_rows = max(pack, (target_block_bytes // (_LANES * itemsize)) // pack * pack)
    if rows <= target_rows:
        return rows, 1, 1                       # single full-extent tile
    tiles_total = _cdiv(rows, target_rows)
    ns = max(1, min(num_cores, tiles_total))
    while ns >= 1:
        tps = _cdiv(tiles_total, ns)
        while tps >= 1:
            t = ns * tps
            rt = _cdiv(_cdiv(rows, t), pack) * pack
            if (t - 1) * rt < rows:             # no fully-empty grid tile
                return rt, ns, tps
            tps -= 1
        ns -= 1
    return rows, 1, 1                           # unreachable: ns == 1 always succeeds


def _sum_of_squares(zf, rows, itemsize, pack, target_block_bytes):
    """Global sum of squares of a (rows, 128) array via a streaming Pallas kernel."""
    num_cores = _tensorcores_per_chip()
    rows_tile, num_splits, tiles_per_split = _plan_tiles(
        rows, pack, itemsize, target_block_bytes, num_cores)
    grid_tiles = num_splits * tiles_per_split
    last_valid = rows - (grid_tiles - 1) * rows_tile     # rows in the final tile
    need_partial = last_valid != rows_tile

    def kernel(z_ref, out_ref):
        c = pl.program_id(0)
        j = pl.program_id(1)

        @pl.when(j == 0)
        def _():
            out_ref[...] = jnp.zeros_like(out_ref)       # (8,128) accumulator init

        def chunk_ssq(start, nrows):
            # Steady state: load -> upcast -> square -> fold to (8,128).  All VPU.
            blk = z_ref[pl.ds(start, nrows), :].astype(jnp.float32)
            sq = blk * blk
            if nrows > 8:
                # Tile-aligned reshape; axis-0 sum is plain vreg adds (no XLU).
                sq = jnp.sum(sq.reshape(nrows // 8, 8, _LANES), axis=0)
            return sq

        def fold_rows(nrows):
            n_full = nrows // _CHUNK_ROWS
            rem = nrows % _CHUNK_ROWS                    # multiple of pack (>= 8) if > 0
            part = jnp.zeros((8, _LANES), jnp.float32)
            if n_full > 0:
                def body(i, carry):
                    start = pl.multiple_of(i * _CHUNK_ROWS, _CHUNK_ROWS)
                    return carry + chunk_ssq(start, _CHUNK_ROWS)
                part = jax.lax.fori_loop(0, n_full, body, part)
            if rem > 0:
                part = part + chunk_ssq(n_full * _CHUNK_ROWS, rem)
            out_ref[...] += part

        if need_partial:
            # Only the single boundary tile takes the shorter (static) path; the
            # garbage region of its VMEM window is simply never read.
            is_last = jnp.logical_and(c == num_splits - 1, j == tiles_per_split - 1)

            @pl.when(is_last)
            def _():
                fold_rows(last_valid)

            @pl.when(jnp.logical_not(is_last))
            def _():
                fold_rows(rows_tile)
        else:
            fold_rows(rows_tile)

    tile_bytes = rows_tile * _LANES * itemsize
    # 2x double-buffered input + ~1 MiB of chunk temporaries + tiny output.
    vmem_limit = int(2 * tile_bytes + (6 << 20))
    split_sem = (getattr(pltpu, "CORE_PARALLEL", "parallel")
                 if num_splits > 1 else "arbitrary")

    partials = pl.pallas_call(
        kernel,
        out_shape=jax.ShapeDtypeStruct((num_splits * 8, _LANES), jnp.float32),
        grid_spec=pltpu.PrefetchScalarGridSpec(
            num_scalar_prefetch=0,
            grid=(num_splits, tiles_per_split),
            in_specs=[pl.BlockSpec((rows_tile, _LANES),
                                   lambda c, j: (c * tiles_per_split + j, 0))],
            out_specs=pl.BlockSpec((8, _LANES), lambda c, j: (c, 0)),
        ),
        compiler_params=pltpu.CompilerParams(
            dimension_semantics=(split_sem, "arbitrary"),
            vmem_limit_bytes=vmem_limit,
        ),
    )(zf)
    # Tiny (num_splits*8, 128) reduction done in plain JAX.
    return jnp.sum(partials)


def glow_loss_pallas(z, sldj, k=256, target_block_bytes=8 * 1024 * 1024):
    """nll = -mean_n[ -0.5*sum(z_n^2) - D*(0.5*log(2*pi) + log k) + sldj_n ]."""
    N = z.shape[0]
    D = int(np.prod(z.shape[1:]))
    total = N * D
    itemsize = int(np.dtype(z.dtype).itemsize)
    pack = _sublane_pack(itemsize)

    flat = z.reshape(-1)
    rows = (total // (_LANES * pack)) * pack       # pack-aligned row count for the kernel
    main = rows * _LANES

    if main < total:
        # Ragged tail (< pack*128 + 128 elements): plain JAX, no full pad copy.
        tail = flat[main:].astype(jnp.float32)
        ssq = jnp.sum(tail * tail)
    else:
        ssq = jnp.float32(0.0)

    if rows > 0:
        zf = flat[:main].reshape(rows, _LANES)     # free reshape when main == total
        ssq = ssq + _sum_of_squares(zf, rows, itemsize, pack, target_block_bytes)

    const = D * (0.5 * np.log(2.0 * np.pi) + np.log(float(k)))
    return 0.5 * ssq / N + const - jnp.mean(sldj.astype(jnp.float32))


def glow_loss_ref(z, sldj, k=256):
    """Pure-JAX reference matching the PyTorch forward exactly."""
    n = z.shape[0]
    d = int(np.prod(z.shape[1:]))
    zf = z.astype(jnp.float32)
    prior_ll = -0.5 * (zf ** 2 + np.log(2.0 * np.pi))
    prior_ll = prior_ll.reshape(n, -1).sum(-1) - np.log(k) * d
    ll = prior_ll + sldj.astype(jnp.float32)
    return -ll.mean()


if __name__ == "__main__":
    key = jax.random.PRNGKey(0)
    kz, ks, kz2, ks2, kz3, kz4 = jax.random.split(key, 6)

    # Primary example: Glow output z in NCHW, per-sample sldj.
    z = jax.random.normal(kz, (2, 4, 16, 16), dtype=jnp.float32)
    sldj = jax.random.normal(ks, (2,), dtype=jnp.float32) * 10.0
    nll = jax.block_until_ready(glow_loss_pallas(z, sldj, k=256))
    ref = glow_loss_ref(z, sldj, k=256)
    assert jnp.allclose(nll, ref, rtol=1e-5, atol=1e-3), (nll, ref)

    # bf16 input: 16-row sublane packing; upcast happens inside the kernel.
    z_bf = z.astype(jnp.bfloat16)
    nll_bf = jax.block_until_ready(glow_loss_pallas(z_bf, sldj, k=256))
    ref_bf = glow_loss_ref(z_bf, sldj, k=256)
    assert jnp.allclose(nll_bf, ref_bf, rtol=1e-5, atol=1e-3), (nll_bf, ref_bf)

    # Non-128-divisible element count (plain-JAX tail) + forced multi-tile grid.
    z2 = jax.random.normal(kz2, (2, 3, 20, 20), dtype=jnp.float32)
    sldj2 = jax.random.normal(ks2, (2,), dtype=jnp.float32) * 10.0
    nll2 = jax.block_until_ready(
        glow_loss_pallas(z2, sldj2, k=256, target_block_bytes=4096))
    ref2 = glow_loss_ref(z2, sldj2, k=256)
    assert jnp.allclose(nll2, ref2, rtol=1e-5, atol=1e-3), (nll2, ref2)

    # Partial (statically specialized) final tile: rows=24 with rows_tile=16.
    z3 = jax.random.normal(kz3, (2, 3, 16, 32), dtype=jnp.float32)
    nll3 = jax.block_until_ready(
        glow_loss_pallas(z3, sldj, k=256, target_block_bytes=8192))
    ref3 = glow_loss_ref(z3, sldj, k=256)
    assert jnp.allclose(nll3, ref3, rtol=1e-5, atol=1e-3), (nll3, ref3)

    # Larger tensor: exercises the in-tile fori_loop over 1024-row chunks.
    z4 = jax.random.normal(kz4, (2, 8, 128, 128), dtype=jnp.float32)
    nll4 = jax.block_until_ready(glow_loss_pallas(z4, sldj, k=256))
    ref4 = glow_loss_ref(z4, sldj, k=256)
    assert jnp.allclose(nll4, ref4, rtol=1e-5, atol=1e-3), (nll4, ref4)

    # bf16 multi-tile path (small tile target -> several grid steps).
    z4_bf = z4.astype(jnp.bfloat16)
    nll4_bf = jax.block_until_ready(
        glow_loss_pallas(z4_bf, sldj, k=256, target_block_bytes=256 * 1024))
    ref4_bf = glow_loss_ref(z4_bf, sldj, k=256)
    assert jnp.allclose(nll4_bf, ref4_bf, rtol=1e-5, atol=1e-3), (nll4_bf, ref4_bf)

    print("KERNEL_OK")
</pallas_src>

<mosaic_0001>
module attributes {stable_mosaic.version = 11 : i64} {
  func.func @kernel(%arg0: i32, %arg1: i32, %arg2: memref<16x128xf32, #tpu.memory_space<vmem>>, %arg3: memref<8x128xf32, #tpu.memory_space<vmem>>) attributes {dimension_semantics = [#tpu.dimension_semantics<arbitrary>, #tpu.dimension_semantics<arbitrary>], iteration_bounds = array<i64: 1, 1>, scalar_prefetch = 0 : i64, scratch_operands = 0 : i64, tpu.core_type = #tpu.core_type<tc>, window_params = [{transform_indices = @transform_0, window_bounds = array<i64: 16, 128>}, {transform_indices = @transform_1, window_bounds = array<i64: 8, 128>}]} {
    %c0_i32 = arith.constant 0 : i32
    %0 = arith.cmpi eq, %arg1, %c0_i32 : i32
    %1 = arith.extui %0 : i1 to i32
    %c0_i32_0 = arith.constant 0 : i32
    %2 = arith.cmpi ne, %1, %c0_i32_0 : i32
    scf.if %2 {
      %cst_7 = arith.constant 0.000000e+00 : f32
      %12 = vector.broadcast %cst_7 : f32 to vector<8x128xf32>
      %c0_8 = arith.constant 0 : index
      %c0_9 = arith.constant 0 : index
      %13 = vector.load %arg3[%c0_8, %c0_9] : memref<8x128xf32, #tpu.memory_space<vmem>>, vector<8x128xf32>
      tpu.vector_store %arg3[%c0_8, %c0_9], %12 {strides = array<i32>} : memref<8x128xf32, #tpu.memory_space<vmem>>, vector<8x128xf32>,
    } else {
    }
    %cst = arith.constant 0.000000e+00 : f32
    %3 = vector.broadcast %cst : f32 to vector<8x128xf32>
    %c0 = arith.constant 0 : index
    %c0_1 = arith.constant 0 : index
    %4 = vector.load %arg2[%c0, %c0_1] : memref<16x128xf32, #tpu.memory_space<vmem>>, vector<16x128xf32>
    %5 = arith.mulf %4, %4 : vector<16x128xf32>
    %6 = vector.shape_cast %5 : vector<16x128xf32> to vector<2x8x128xf32>
    %cst_2 = arith.constant dense<0.000000e+00> : vector<8x128xf32>
    %7 = vector.multi_reduction <add>, %6, %cst_2 [0] : vector<2x8x128xf32> to vector<8x128xf32>
    %8 = arith.addf %3, %7 : vector<8x128xf32>
    %c0_3 = arith.constant 0 : index
    %c0_4 = arith.constant 0 : index
    %9 = vector.load %arg3[%c0_3, %c0_4] : memref<8x128xf32, #tpu.memory_space<vmem>>, vector<8x128xf32>
    %10 = arith.addf %9, %8 : vector<8x128xf32>
    %c0_5 = arith.constant 0 : index
    %c0_6 = arith.constant 0 : index
    %11 = vector.load %arg3[%c0_5, %c0_6] : memref<8x128xf32, #tpu.memory_space<vmem>>, vector<8x128xf32>
    tpu.vector_store %arg3[%c0_5, %c0_6], %10 {strides = array<i32>} : memref<8x128xf32, #tpu.memory_space<vmem>>, vector<8x128xf32>,
    return
  }
  func.func @transform_0(%arg0: i32, %arg1: i32) -> (i32, i32) {
    %c1_i32 = arith.constant 1 : i32
    %0 = arith.muli %arg0, %c1_i32 : i32
    %1 = arith.addi %0, %arg1 : i32
    %c0_i32 = arith.constant 0 : i32
    %c0_i32_0 = arith.constant 0 : i32
    return %1, %c0_i32 : i32, i32
  }
  func.func @transform_1(%arg0: i32, %arg1: i32) -> (i32, i32) {
    %c0_i32 = arith.constant 0 : i32
    %c0_i32_0 = arith.constant 0 : i32
    return %arg0, %c0_i32 : i32, i32
  }
}

</mosaic_0001>

<llo_original>
// kernel: tpu_custom_call.1
$region0: #{tpu_custom_call.1}
  #allocation0 [shape = 'u32[]', space=smem, size = 0x4, offset = 0x4, fixed_abs, tag = 'smem constant byte address 0x4 - core index']
  #allocation1 [shape = 'u32[144,128]{1,0:T(1,128)}', space=vmem, size = 0x12000, scoped, tag = 'internal scratch']
  %s0 = inlined_call_operand.hbm [shape: f32[16,128], index: 0, kind: input, shape index: {}]
  %s1 = inlined_call_operand.hbm [shape: f32[8,128], index: 1, kind: output, shape index: {}]
  %s2 = sld [smem:[#allocation0]]
  $region22: #{tpu_custom_call.1} parent=0
    _
  %s4 = ssub.s32 1, %s2
  %s5 = scalar_select 0, %s4, %s2
  $region1: #{tpu_custom_call.1} parent=0
    #allocation2 [shape = 'u8[8192]{0}', space=vmem, size = 0x2000, scoped, tag = 'input window, operand 0, single buffered']
    #allocation3 [shape = 's32[1]{0}', space=sflag, size = 0x4, scoped, tag = 'scoped memory for tpu_custom_call.1']
    #allocation4 [shape = 's32[1]{0}', space=sflag, size = 0x4, scoped, tag = 'scoped memory for tpu_custom_call.1']
    #allocation5 [shape = 'u8[4096]{0}', space=vmem, size = 0x1000, scoped, tag = 'output window, operand 0, single buffered']
    %6 = vsyncpa [#allocation3], 0
    %7 = vsyncpa [#allocation4], 0
    // Predicated region
    $region2: #{tpu_custom_call.1} parent=1 // pred_check
      _
    $region3: #{tpu_custom_call.1} parent=1 // pred_check_branch
      %9 = sbr.rel (0) target = $region5
    $region4: #{tpu_custom_call.1} parent=1 // pred_region
      %s10 = sadd.s32 0, 0
      %s11 = smul.u32 2, %s10
      %s13 = ssub.s32 256, 256
      %14 = vsyncadd [#allocation3], %s13
      %s15 = smul.addr %s11, 128
      %s16 = scalar_lea.hbm %s0, %s15
      %s17 = sshll.u32 [#allocation2], 4
      %s18 = int_to_ptr.vmem [resolvable:$true] %s17
      %23 = dma.hbm_to_vmem [thread:$0]  %s16, 256, %s18, [#allocation3], 128, 128, 8
    $region5: #{tpu_custom_call.1} parent=1 // pred_fallthru
      _
    // Predicated region
    $region6: #{tpu_custom_call.1} parent=1 // pred_check
      _
    $region7: #{tpu_custom_call.1} parent=1 // pred_check_branch
      %25 = sbr.rel (0) target = $region9
    $region8: #{tpu_custom_call.1} parent=1 // pred_region
      %26 = dma.done [#allocation3], 256
    $region9: #{tpu_custom_call.1} parent=1 // pred_fallthru
      _
    %s27 = sadd.s32 0, 0
    %s28 = smul.u32 2, %s27
    %p29 = scmp.eq.s32.totalorder 0, 0
    // Predicated region
    $region10: #{tpu_custom_call.1} parent=1 // pred_check
      %p30 = pneg %p29
    $region11: #{tpu_custom_call.1} parent=1 // pred_check_branch
      %32 = sbr.rel (%p30) target = $region13
    $region12: #{tpu_custom_call.1} parent=1 // pred_region
      %33 = vst [vmem:[#allocation5] sm:$0xff] 0.0
    $region13: #{tpu_custom_call.1} parent=1 // pred_fallthru
      _
    %v34 = vld [vmem:[#allocation2] sm:$0xff]
    %v35 = vld [vmem:[#allocation2 + $0x8] sm:$0xff]
    %v36 = vmul.f32 %v34, %v34
    %v37 = vmul.f32 %v35, %v35
    %v38 = vadd.f32 %v36, %v37
    %v39 = vadd.f32 %v38, 0.0
    %v40 = vld [vmem:[#allocation5] sm:$0xff]
    %v41 = vadd.f32 %v40, %v39
    %42 = vst [vmem:[#allocation5] sm:$0xff] %v41
    // Predicated region
    $region14: #{tpu_custom_call.1} parent=1 // pred_check
      _
    $region15: #{tpu_custom_call.1} parent=1 // pred_check_branch
      %44 = sbr.rel (0) target = $region17
    $region16: #{tpu_custom_call.1} parent=1 // pred_region
      %s46 = ssub.s32 128, 128
      %47 = vsyncadd [#allocation4], %s46
      %s49 = sshll.u32 [#allocation5], 4
      %s50 = int_to_ptr.vmem [resolvable:$true] %s49
      %52 = dma.vmem_to_hbm [thread:$0]  %s50, 128, %s1, [#allocation4]
    $region17: #{tpu_custom_call.1} parent=1 // pred_fallthru
      _
    // Predicated region
    $region18: #{tpu_custom_call.1} parent=1 // pred_check
      _
    $region19: #{tpu_custom_call.1} parent=1 // pred_check_branch
      %54 = sbr.rel (0) target = $region21
    $region20: #{tpu_custom_call.1} parent=1 // pred_region
      %55 = dma.done [#allocation4], 128
    $region21: #{tpu_custom_call.1} parent=1 // pred_fallthru
      _
    %56 = vsyncpa [#allocation3], 1
    %57 = vsyncpa [#allocation4], 1

</llo_original>
